<compile_context>
chip_gen: v5e
topology: v5e:2x2
jax: 0.10.0
libtpu: 0.0.40
codegen_flags: <defaults>
</compile_context>

<pallas_src>
import functools

import jax
import jax.numpy as jnp
from jax.experimental import pallas as pl
from jax.experimental.pallas import tpu as pltpu


_P_TILE_MAX = 2048        # point-axis tile (multiple of 128; VMEM friendly)
_LANE = 128


# ---------------------------------------------------------------------------
# Pallas kernels
# ---------------------------------------------------------------------------
def _ce_kernel(logits_ref, labels_ref, w_ref, out_ref):
    """Weighted softmax cross-entropy (== F.cross_entropy with class weights,
    reduction='mean').  Labels arrive as int32 (no one-hot DMA).
    NOTE: labels deliberately stay as an (N, 1) VMEM block — CE is tiny and
    the lane-dense label layout was reviewed as a negligible win."""
    x = logits_ref[...].astype(jnp.float32)                   # [N, K]
    labels = labels_ref[...]                                   # [N, 1] int32
    w = w_ref[...].astype(jnp.float32)                         # [1, K]
    n, k = x.shape
    m = jnp.max(x, axis=-1, keepdims=True)
    z = x - m
    lse = jnp.log(jnp.sum(jnp.exp(z), axis=-1, keepdims=True))
    logp = z - lse                                             # [N, K]
    cls = jax.lax.broadcasted_iota(jnp.int32, (n, k), 1)
    onehot = cls == labels                                     # [N, K] bool
    row_w = jnp.sum(jnp.where(onehot, w, 0.0), axis=-1, keepdims=True)    # [N,1]
    nll = -jnp.sum(jnp.where(onehot, logp, 0.0), axis=-1, keepdims=True)  # [N,1]
    num = jnp.sum(row_w * nll, axis=0, keepdims=True)
    den = jnp.sum(row_w, axis=0, keepdims=True)
    out_ref[...] = num / den


def _point_sample_kernel(mask_ref, coords_ref, out_ref, *, h_true, w_true):
    """Bilinear-sample one (width-padded) mask at a tile of points.

    Separable "hat" bilinear weights (f32 construction), bf16 mask @ bf16
    column-weights on the MXU (f32 accumulation), f32 row-weight multiply +
    sublane reduce.  Out-of-range corners and zero-padded mask columns
    contribute exactly 0 -> reproduces F.grid_sample(align_corners=False,
    padding_mode='zeros')."""
    m = mask_ref[0]                                      # (H, W_pad), bf16
    c = coords_ref[0].astype(jnp.float32)                # (2, P_t)
    cx = c[0:1, :]
    cy = c[1:2, :]
    h, w_pad = m.shape
    p = c.shape[-1]
    x = cx * w_true - 0.5                                # align_corners=False
    y = cy * h_true - 0.5
    iw = jax.lax.broadcasted_iota(jnp.int32, (w_pad, p), 0).astype(jnp.float32)
    ih = jax.lax.broadcasted_iota(jnp.int32, (h, p), 0).astype(jnp.float32)
    b = jnp.maximum(1.0 - jnp.abs(iw - x), 0.0)          # (W_pad, P) col weights
    a = jnp.maximum(1.0 - jnp.abs(ih - y), 0.0)          # (H,     P) row weights
    s = jnp.dot(m.astype(jnp.bfloat16), b.astype(jnp.bfloat16),
                preferred_element_type=jnp.float32)      # (H, P) on the MXU
    out_ref[...] = jnp.sum(a * s, axis=0, keepdims=True).reshape(1, 1, -1)


def _point_loss_kernel(logits_ref, labels_ref, mask_out_ref, dice_out_ref):
    """Sigmoid-BCE (per-mask mean, summed over masks) + dice (summed over
    masks) over lane-dense (N, P) point logits/labels; all math in f32,
    exp(-|x|) shared between log1p and the approx-reciprocal sigmoid."""
    x = logits_ref[...].astype(jnp.float32)               # (N, P)
    t = labels_ref[...].astype(jnp.float32)
    e = jnp.exp(-jnp.abs(x))
    bce = jnp.maximum(x, 0.0) - x * t + jnp.log1p(e)
    r = pl.reciprocal(1.0 + e, approx=True)
    sig = jnp.where(x >= 0.0, r, e * r)                    # sigmoid(x)
    inv_p = 1.0 / x.shape[-1]
    mean_bce = jnp.sum(bce, axis=1, keepdims=True) * inv_p            # (N, 1)
    inter = jnp.sum(sig * t, axis=1, keepdims=True)
    psum = jnp.sum(sig, axis=1, keepdims=True)
    tsum = jnp.sum(t, axis=1, keepdims=True)
    dice = 1.0 - (2.0 * inter + 1.0) / (psum + tsum + 1.0)            # (N, 1)
    mask_out_ref[...] = jnp.sum(mean_bce, axis=0, keepdims=True)      # (1, 1)
    dice_out_ref[...] = jnp.sum(dice, axis=0, keepdims=True)          # (1, 1)


# ---------------------------------------------------------------------------
# Wrappers
# ---------------------------------------------------------------------------
def weighted_cross_entropy(logits_2d, labels_2d, class_weights):
    n, k = logits_2d.shape
    out = pl.pallas_call(
        _ce_kernel,
        out_shape=jax.ShapeDtypeStruct((1, 1), jnp.float32),
        in_specs=[pl.BlockSpec(memory_space=pltpu.MemorySpace.VMEM)] * 3,
        out_specs=pl.BlockSpec(memory_space=pltpu.MemorySpace.VMEM),
    )(logits_2d, labels_2d.astype(jnp.int32),
      class_weights.reshape(1, k).astype(jnp.float32))
    return out[0, 0]


def _sampling_vmem_bytes(h, w_pad, p_tile, mask_itemsize):
    mask_block = h * w_pad * mask_itemsize
    coords_block = 2 * p_tile * 4
    out_block = p_tile * 4
    inter = p_tile * (3 * h + 3 * w_pad) * 4          # a, s, b + f32 temps
    budget = 2 * (mask_block + coords_block + out_block) + inter + (4 << 20)
    return int(min(max(budget, 32 << 20), 64 << 20))  # stay under v7x 64 MiB/TC


def pallas_point_sample(masks, point_coords):
    """masks [N, H, W] (bf16 recommended), point_coords [N, P, 2] in [0,1]
    as (x, y).  Returns f32 [N, P] bilinear samples (== detectron2
    point_sample, align_corners=False)."""
    n, h, w = masks.shape
    p = point_coords.shape[1]
    # Pad the contraction width W to a lane multiple: exact, since padded
    # (zero) columns only ever multiply weights of out-of-range corners.
    w_pad = max(_LANE, ((w + _LANE - 1) // _LANE) * _LANE)
    if w_pad != w:
        masks = jnp.pad(masks, ((0, 0), (0, 0), (0, w_pad - w)))
    # Tile the point axis so (H, P_tile)/(W, P_tile) intermediates fit VMEM.
    if p <= _P_TILE_MAX:
        p_tile, p_pad = p, p
    else:
        p_tile = _P_TILE_MAX
        p_pad = ((p + p_tile - 1) // p_tile) * p_tile
    coords_t = jnp.transpose(point_coords, (0, 2, 1)).astype(jnp.float32)  # (N,2,P)
    if p_pad != p:
        coords_t = jnp.pad(coords_t, ((0, 0), (0, 0), (0, p_pad - p)))
    kernel = functools.partial(_point_sample_kernel, h_true=h, w_true=w)
    out = pl.pallas_call(
        kernel,
        out_shape=jax.ShapeDtypeStruct((n, 1, p_pad), jnp.float32),
        grid=(n, p_pad // p_tile),
        in_specs=[
            pl.BlockSpec((1, h, w_pad), lambda i, j: (i, 0, 0)),
            pl.BlockSpec((1, 2, p_tile), lambda i, j: (i, 0, j)),
        ],
        out_specs=pl.BlockSpec((1, 1, p_tile), lambda i, j: (i, 0, j)),
        compiler_params=pltpu.CompilerParams(
            dimension_semantics=("parallel", "arbitrary"),
            vmem_limit_bytes=_sampling_vmem_bytes(h, w_pad, p_tile,
                                                  masks.dtype.itemsize)),
    )(masks, coords_t)
    return out[:, 0, :p]


def point_losses(point_logits, point_labels):
    """Returns (sum over masks of per-mask mean-BCE, sum over masks of dice)."""
    mask_sum, dice_sum = pl.pallas_call(
        _point_loss_kernel,
        out_shape=(jax.ShapeDtypeStruct((1, 1), jnp.float32),
                   jax.ShapeDtypeStruct((1, 1), jnp.float32)),
        in_specs=[pl.BlockSpec(memory_space=pltpu.MemorySpace.VMEM)] * 2,
        out_specs=(pl.BlockSpec(memory_space=pltpu.MemorySpace.VMEM),
                   pl.BlockSpec(memory_space=pltpu.MemorySpace.VMEM)),
    )(point_logits, point_labels)
    return mask_sum[0, 0], dice_sum[0, 0]


# ---------------------------------------------------------------------------
# JAX glue: target-label gather, point selection, matching
# ---------------------------------------------------------------------------
def point_sample_labels(target_masks, point_coords):
    """Bilinear-sample full-resolution target masks at P points via a
    4-corner gather (O(4P) per mask) — replaces the O(Ht*Wt*P) dense
    contraction.  Matches grid_sample(align_corners=False, zeros padding).
    TODO(synk): an in-Pallas DMA row-gather of the <=2P touched rows would
    avoid the XLA gather; Mosaic has no general dynamic-gather lowering."""
    n, h, w = target_masks.shape
    m = target_masks.astype(jnp.float32).reshape(n, h * w)
    x = point_coords[..., 0] * w - 0.5
    y = point_coords[..., 1] * h - 0.5
    x0 = jnp.floor(x)
    y0 = jnp.floor(y)
    wx1 = x - x0
    wy1 = y - y0
    wx0 = 1.0 - wx1
    wy0 = 1.0 - wy1
    x0 = x0.astype(jnp.int32)
    y0 = y0.astype(jnp.int32)

    def corner(xi, yi, wgt):
        inb = (xi >= 0) & (xi < w) & (yi >= 0) & (yi < h)
        flat = jnp.clip(yi, 0, h - 1) * w + jnp.clip(xi, 0, w - 1)
        v = jnp.take_along_axis(m, flat, axis=1)
        return jnp.where(inb, v * wgt, 0.0)

    return (corner(x0, y0, wx0 * wy0) + corner(x0 + 1, y0, wx1 * wy0)
            + corner(x0, y0 + 1, wx0 * wy1) + corner(x0 + 1, y0 + 1, wx1 * wy1))


def get_uncertain_points_and_logits(src_masks, num_points, oversample_ratio,
                                    importance_sample_ratio, rng):
    """get_uncertain_point_coords_with_randomness + reuse of the oversampled
    source logits for the importance-sampled points (bit-identical bilinear
    values); only the random remainder gets a fresh Pallas sampling pass."""
    n = src_masks.shape[0]
    num_sampled = int(num_points * oversample_ratio)
    k1, k2 = jax.random.split(rng)
    over_coords = jax.random.uniform(k1, (n, num_sampled, 2), jnp.float32)
    over_logits = pallas_point_sample(src_masks, over_coords)       # (N, n_over)
    uncertainty = -jnp.abs(over_logits)                              # calculate_uncertainty
    num_unc = int(importance_sample_ratio * num_points)
    num_rand = num_points - num_unc
    if num_unc > 0:
        # TODO(synk): top_k over the oversampled points stays in XLA.
        idx = jax.lax.top_k(uncertainty, num_unc)[1]
        coords = jnp.take_along_axis(over_coords, idx[..., None], axis=1)
        logits = jnp.take_along_axis(over_logits, idx, axis=1)
    else:
        coords = over_coords[:, :0]
        logits = over_logits[:, :0]
    if num_rand > 0:
        rand_coords = jax.random.uniform(k2, (n, num_rand, 2), jnp.float32)
        rand_logits = pallas_point_sample(src_masks, rand_coords)
        coords = jnp.concatenate([coords, rand_coords], axis=1)
        logits = jnp.concatenate([logits, rand_logits], axis=1)
    return coords, logits


def identity_matcher(outputs, targets):
    # TODO(synk): Hungarian matching (scipy.linear_sum_assignment) is an
    # injected dependency of the original module; identity matching used here.
    indices = []
    for t in targets:
        n = int(t['labels'].shape[0])
        indices.append((jnp.arange(n, dtype=jnp.int32),
                        jnp.arange(n, dtype=jnp.int32)))
    return indices


# ---------------------------------------------------------------------------
# SetCriterion (forward-pass semantics of the PyTorch module)
# ---------------------------------------------------------------------------
class SetCriterionPallas:
    def __init__(self, num_classes, matcher, weight_dict, eos_coef, losses,
                 num_points, oversample_ratio, importance_sample_ratio):
        self.num_classes = num_classes
        self.matcher = matcher
        self.weight_dict = weight_dict
        self.eos_coef = eos_coef
        self.losses = losses
        empty_weight = jnp.ones((num_classes + 1,), jnp.float32)
        self.empty_weight = empty_weight.at[-1].set(eos_coef)
        self.num_points = num_points
        self.oversample_ratio = oversample_ratio
        self.importance_sample_ratio = importance_sample_ratio
        self._rng = jax.random.PRNGKey(1234)

    def _next_rng(self):
        self._rng, sub = jax.random.split(self._rng)
        return sub

    # -- classification loss -------------------------------------------------
    def loss_labels(self, outputs, targets, indices, num_masks):
        if len(targets) == 0:
            return {'loss_ce': jnp.zeros((), outputs['pred_logits'].dtype)}
        src_logits = outputs['pred_logits']                       # [B, Q, K]
        B, Q, K = src_logits.shape
        batch_idx = jnp.concatenate(
            [jnp.full_like(src, b) for b, (src, _) in enumerate(indices)])
        src_idx = jnp.concatenate([src for src, _ in indices])
        labels_o = jnp.concatenate(
            [t['labels'][tgt] for t, (_, tgt) in zip(targets, indices)]).astype(jnp.int32)
        target_classes = jnp.full((B, Q), self.num_classes, jnp.int32)
        target_classes = target_classes.at[batch_idx, src_idx].set(labels_o)
        loss_ce = weighted_cross_entropy(src_logits.reshape(-1, K),
                                         target_classes.reshape(-1, 1),
                                         self.empty_weight)
        return {'loss_ce': loss_ce}

    # -- mask losses ----------------------------------------------------------
    def loss_masks(self, outputs, targets, indices, num_masks):
        if len(targets) == 0:
            z = jnp.zeros((), outputs['pred_masks'].dtype)
            return {'loss_mask': z, 'loss_dice': z}
        pred_masks = outputs['pred_masks']                        # [B, Q, H, W]
        # nested_tensor_from_tensor_list: zero-pad target masks to a common size.
        max_ht = max(int(t['masks'].shape[1]) for t in targets)
        max_wt = max(int(t['masks'].shape[2]) for t in targets)
        src_list, tgt_list = [], []
        for b, (src, tgt) in enumerate(indices):
            src_list.append(pred_masks[b][src])                   # [n_b, H, W]
            tm = targets[b]['masks'][tgt]
            dh, dw = max_ht - int(tm.shape[1]), max_wt - int(tm.shape[2])
            if dh or dw:
                tm = jnp.pad(tm, ((0, 0), (0, dh), (0, dw)))
            tgt_list.append(tm)
        # bf16 is the native MXU dtype; cast once, reused by both sampling passes.
        src_masks = jnp.concatenate(src_list, axis=0).astype(jnp.bfloat16)
        target_masks = jnp.concatenate(tgt_list, axis=0)

        # Point selection (torch.no_grad in the reference) + reused src logits.
        point_coords, point_logits = get_uncertain_points_and_logits(
            src_masks, self.num_points, self.oversample_ratio,
            self.importance_sample_ratio, self._next_rng())
        point_coords = jax.lax.stop_gradient(point_coords)
        # Target point labels (torch.no_grad in the reference).
        point_labels = jax.lax.stop_gradient(
            point_sample_labels(target_masks, point_coords))

        mask_sum, dice_sum = point_losses(point_logits, point_labels)
        return {'loss_mask': mask_sum / num_masks,
                'loss_dice': dice_sum / num_masks}

    def get_loss(self, loss, outputs, targets, indices, num_masks):
        loss_map = {'labels': self.loss_labels, 'masks': self.loss_masks}
        assert loss in loss_map, f'do you really want to compute {loss} loss?'
        return loss_map[loss](outputs, targets, indices, num_masks)

    def forward(self, outputs, targets):
        outputs_without_aux = {k: v for k, v in outputs.items() if k != 'aux_outputs'}
        indices = self.matcher(outputs_without_aux, targets)
        # TODO(synk): torch.distributed all_reduce of num_masks omitted (single host).
        num_masks = float(sum(int(t['labels'].shape[0]) for t in targets))
        num_masks = max(num_masks / 1.0, 1.0)
        losses = {}
        for loss in self.losses:
            losses.update(self.get_loss(loss, outputs, targets, indices, num_masks))
        if 'aux_outputs' in outputs:
            for i, aux_outputs in enumerate(outputs['aux_outputs']):
                indices = self.matcher(aux_outputs, targets)
                for loss in self.losses:
                    l_dict = self.get_loss(loss, aux_outputs, targets, indices, num_masks)
                    losses.update({k + f'_{i}': v for k, v in l_dict.items()})
        return losses


# ---------------------------------------------------------------------------
if __name__ == "__main__":
    B, Q, C = 2, 8, 4          # batch, queries, num_classes (no-object appended)
    H = W = 16
    num_points = 16
    n_t = 3                    # targets per image

    key = jax.random.PRNGKey(0)
    k1, k2, k3, k4 = jax.random.split(key, 4)
    pred_logits = jax.random.normal(k1, (B, Q, C + 1), jnp.float32)
    pred_masks = jax.random.normal(k2, (B, Q, H, W), jnp.float32)

    targets = []
    label_keys = jax.random.split(k3, B)
    mask_keys = jax.random.split(k4, B)
    for b in range(B):
        labels = jax.random.randint(label_keys[b], (n_t,), 0, C)
        masks = (jax.random.uniform(mask_keys[b], (n_t, H, W)) > 0.5).astype(jnp.float32)
        targets.append({'labels': labels, 'masks': masks})

    criterion = SetCriterionPallas(
        num_classes=C,
        matcher=identity_matcher,
        weight_dict={'loss_ce': 1.0, 'loss_mask': 5.0, 'loss_dice': 5.0},
        eos_coef=0.1,
        losses=['labels', 'masks'],
        num_points=num_points,
        oversample_ratio=3.0,
        importance_sample_ratio=0.75,
    )

    losses = criterion.forward({'pred_logits': pred_logits, 'pred_masks': pred_masks},
                               targets)
    for leaf in jax.tree_util.tree_leaves(losses):
        jax.block_until_ready(leaf)
    print("KERNEL_OK")
</pallas_src>

<mosaic_0001>
module attributes {stable_mosaic.version = 11 : i64} {
  func.func @_ce_kernel(%arg0: memref<16x5xf32, #tpu.memory_space<vmem>>, %arg1: memref<16x1xi32, #tpu.memory_space<vmem>>, %arg2: memref<1x5xf32, #tpu.memory_space<vmem>>, %arg3: memref<1x1xf32, #tpu.memory_space<vmem>>) attributes {dimension_semantics = [], scalar_prefetch = 0 : i64, scratch_operands = 0 : i64, tpu.core_type = #tpu.core_type<tc>} {
    %c0 = arith.constant 0 : index
    %c0_0 = arith.constant 0 : index
    %0 = vector.load %arg0[%c0, %c0_0] : memref<16x5xf32, #tpu.memory_space<vmem>>, vector<16x5xf32>
    %c0_1 = arith.constant 0 : index
    %c0_2 = arith.constant 0 : index
    %1 = vector.load %arg1[%c0_1, %c0_2] : memref<16x1xi32, #tpu.memory_space<vmem>>, vector<16x1xi32>
    %c0_3 = arith.constant 0 : index
    %c0_4 = arith.constant 0 : index
    %2 = vector.load %arg2[%c0_3, %c0_4] : memref<1x5xf32, #tpu.memory_space<vmem>>, vector<1x5xf32>
    %cst = arith.constant dense<0xFF800000> : vector<16xf32>
    %3 = vector.multi_reduction <maximumf>, %0, %cst [1] : vector<16x5xf32> to vector<16xf32>
    %4 = vector.shape_cast %3 : vector<16xf32> to vector<16x1xf32>
    %5 = vector.broadcast %4 : vector<16x1xf32> to vector<16x5xf32>
    %6 = arith.subf %0, %5 : vector<16x5xf32>
    %7 = math.exp %6 : vector<16x5xf32>
    %cst_5 = arith.constant dense<0.000000e+00> : vector<16xf32>
    %8 = vector.multi_reduction <add>, %7, %cst_5 [1] : vector<16x5xf32> to vector<16xf32>
    %9 = vector.shape_cast %8 : vector<16xf32> to vector<16x1xf32>
    %10 = math.log %9 : vector<16x1xf32>
    %11 = vector.broadcast %10 : vector<16x1xf32> to vector<16x5xf32>
    %12 = arith.subf %6, %11 : vector<16x5xf32>
    %13 = tpu.iota {dimensions = array<i32: 1>} : vector<16x5xi32>
    %14 = vector.broadcast %1 : vector<16x1xi32> to vector<16x5xi32>
    %15 = arith.cmpi eq, %13, %14 : vector<16x5xi32>
    %cst_6 = arith.constant 0.000000e+00 : f32
    %16 = vector.shape_cast %2 : vector<1x5xf32> to vector<1x5xf32>
    %17 = vector.broadcast %16 : vector<1x5xf32> to vector<16x5xf32>
    %18 = vector.broadcast %cst_6 : f32 to vector<16x5xf32>
    %19 = arith.select %15, %17, %18 : vector<16x5xi1>, vector<16x5xf32>
    %cst_7 = arith.constant dense<0.000000e+00> : vector<16xf32>
    %20 = vector.multi_reduction <add>, %19, %cst_7 [1] : vector<16x5xf32> to vector<16xf32>
    %21 = vector.shape_cast %20 : vector<16xf32> to vector<16x1xf32>
    %cst_8 = arith.constant 0.000000e+00 : f32
    %22 = vector.broadcast %cst_8 : f32 to vector<16x5xf32>
    %23 = arith.select %15, %12, %22 : vector<16x5xi1>, vector<16x5xf32>
    %cst_9 = arith.constant dense<0.000000e+00> : vector<16xf32>
    %24 = vector.multi_reduction <add>, %23, %cst_9 [1] : vector<16x5xf32> to vector<16xf32>
    %25 = vector.shape_cast %24 : vector<16xf32> to vector<16x1xf32>
    %cst_10 = arith.constant 0.000000e+00 : f32
    %26 = vector.broadcast %cst_10 : f32 to vector<16x1xf32>
    %27 = arith.subf %26, %25 : vector<16x1xf32>
    %28 = arith.mulf %21, %27 : vector<16x1xf32>
    %cst_11 = arith.constant dense<0.000000e+00> : vector<1xf32>
    %29 = vector.multi_reduction <add>, %28, %cst_11 [0] : vector<16x1xf32> to vector<1xf32>
    %30 = vector.shape_cast %29 : vector<1xf32> to vector<1x1xf32>
    %cst_12 = arith.constant dense<0.000000e+00> : vector<1xf32>
    %31 = vector.multi_reduction <add>, %21, %cst_12 [0] : vector<16x1xf32> to vector<1xf32>
    %32 = vector.shape_cast %31 : vector<1xf32> to vector<1x1xf32>
    %33 = arith.divf %30, %32 : vector<1x1xf32>
    %c0_13 = arith.constant 0 : index
    %c0_14 = arith.constant 0 : index
    %34 = vector.load %arg3[%c0_13, %c0_14] : memref<1x1xf32, #tpu.memory_space<vmem>>, vector<1x1xf32>
    tpu.vector_store %arg3[%c0_13, %c0_14], %33 {strides = array<i32>} : memref<1x1xf32, #tpu.memory_space<vmem>>, vector<1x1xf32>,
    return
  }
}

</mosaic_0001>

<llo_original>
// kernel: tpu_custom_call.1
$region0: #{tpu_custom_call.1}
  #allocation0 [shape = 'u32[]', space=smem, size = 0x4, offset = 0x4, fixed_abs, tag = 'smem constant byte address 0x4 - core index']
  #allocation1 [shape = 'u32[72,128]{1,0:T(1,128)}', space=vmem, size = 0x9000, scoped, tag = 'internal scratch']
  %s0 = inlined_call_operand.vmem [shape: f32[16,5], index: 0, kind: input, shape index: {}]
  %s1 = inlined_call_operand.vmem [shape: s32[16,1], index: 1, kind: input, shape index: {}]
  %s2 = inlined_call_operand.vmem [shape: f32[1,5], index: 2, kind: input, shape index: {}]
  %s3 = inlined_call_operand.hbm [shape: f32[1,1], index: 3, kind: output, shape index: {}]
  %s4 = sld [smem:[#allocation0]]
  $region22: #{tpu_custom_call.1} parent=0
    _
  %s6 = ssub.s32 1, %s4
  %s7 = scalar_select 0, %s6, %s4
  $region1: #{tpu_custom_call.1} parent=0
    #allocation2 [shape = 'u8[512]{0}', space=vmem, size = 0x400, scoped, tag = 'output window, operand 0, single buffered']
    #allocation3 [shape = 's32[1]{0}', space=sflag, size = 0x4, scoped, tag = 'scoped memory for tpu_custom_call.1']
    %8 = vsyncpa [#allocation3], 0
    // Predicated region
    $region2: #{tpu_custom_call.1} parent=1 // pred_check
      _
    $region3: #{tpu_custom_call.1} parent=1 // pred_check_branch
      %10 = sbr.rel (0) target = $region5
    $region4: #{tpu_custom_call.1} parent=1 // pred_region
      _
    $region5: #{tpu_custom_call.1} parent=1 // pred_fallthru
      _
    // Predicated region
    $region6: #{tpu_custom_call.1} parent=1 // pred_check
      _
    $region7: #{tpu_custom_call.1} parent=1 // pred_check_branch
      %12 = sbr.rel (0) target = $region9
    $region8: #{tpu_custom_call.1} parent=1 // pred_region
      _
    $region9: #{tpu_custom_call.1} parent=1 // pred_fallthru
      _
    // Predicated region
    $region10: #{tpu_custom_call.1} parent=1 // pred_check
      _
    $region11: #{tpu_custom_call.1} parent=1 // pred_check_branch
      %14 = sbr.rel (0) target = $region13
    $region12: #{tpu_custom_call.1} parent=1 // pred_region
      _
    $region13: #{tpu_custom_call.1} parent=1 // pred_fallthru
      _
    %v15 = vld [vmem:[%s0] sm:$0xff]
    %v16 = vld [vmem:[%s0 + $0x8] sm:$0xff]
    %v17 = vld [vmem:[%s1] sm:$0xff]
    %v18 = vld [vmem:[%s1 + $0x8] sm:$0xff]
    %v19 = vld [vmem:[%s2] sm:$0x1]
    %vm20 = vcmask 39936
    %v21 = vsel %vm20, %v15, -inf
    %22 = vmax.xlane.f32.xlu0 %v21
    %v23 = vpop.xlane.xlu0 %22
    %v24 = vsel %vm20, %v16, -inf
    %25 = vmax.xlane.f32.xlu0 %v24
    %v26 = vpop.xlane.xlu0 %25
    %v27 = vsub.f32 %v15, %v23
    %v28 = vsub.f32 %v16, %v26
    %v29 = vmul.f32 %v27, 1.442695
    %v30 = vpow.pop %v29
    %v31 = vmul.f32 %v28, 1.442695
    %v32 = vpow.pop %v31
    %v33 = vsel %vm20, %v30, 0.0
    %34 = vadd.xlane.f32.xlu0 %v33
    %v35 = vpop.xlane.xlu0 %34
    %v36 = vsel %vm20, %v32, 0.0
    %37 = vadd.xlane.f32.xlu0 %v36
    %v38 = vpop.xlane.xlu0 %37
    %v39 = vlog2.pop %v35
    %v40 = vmul.f32 %v39, 0.6931472
    %v41 = vlog2.pop %v38
    %v42 = vmul.f32 %v41, 0.6931472
    %v43 = vsub.f32 %v27, %v40
    %v44 = vsub.f32 %v28, %v42
    %v45 = vlaneseq
    %v46 = vand.u32 %v45, 127
    %47 = vset.pattern.permute.xlu0 0
    %48 = vperm.xlu0 %47, %v17
    %v49 = vpop.permute.xlu0 %48
    %50 = vset.pattern.permute.xlu0 0
    %51 = vperm.xlu0 %50, %v18
    %v52 = vpop.permute.xlu0 %51
    %vm53 = vcmp.eq.s32.totalorder %v46, %v49
    %vm54 = vcmp.eq.s32.totalorder %v46, %v52
    %v56 = vperm.slane %v19, 0
    %v58 = vsel %vm53, %v56, 0.0
    %v59 = vsel %vm54, %v56, 0.0
    %v60 = vsel %vm20, %v58, 0.0
    %61 = vadd.xlane.f32.xlu0 %v60
    %v62 = vpop.xlane.xlu0 %61
    %v63 = vsel %vm20, %v59, 0.0
    %64 = vadd.xlane.f32.xlu0 %v63
    %v65 = vpop.xlane.xlu0 %64
    %v66 = vsel %vm53, %v43, 0.0
    %v67 = vsel %vm54, %v44, 0.0
    %v68 = vsel %vm20, %v66, 0.0
    %69 = vadd.xlane.f32.xlu0 %v68
    %v70 = vpop.xlane.xlu0 %69
    %v71 = vsel %vm20, %v67, 0.0
    %72 = vadd.xlane.f32.xlu0 %v71
    %v73 = vpop.xlane.xlu0 %72
    %v74 = vsub.f32 0.0, %v70
    %v75 = vsub.f32 0.0, %v73
    %v76 = vmul.f32 %v62, %v74
    %v77 = vmul.f32 %v65, %v75
    %v78 = vadd.f32 %v76, %v77
    %v79 = vrot.slane %v78, 4
    %v80 = vadd.f32 %v78, %v79
    %v81 = vrot.slane %v80, 2
    %v82 = vadd.f32 %v80, %v81
    %v83 = vrot.slane %v82, 1
    %v84 = vadd.f32 %v82, %v83
    %v85 = vadd.f32 %v62, %v65
    %v86 = vrot.slane %v85, 4
    %v87 = vadd.f32 %v85, %v86
    %v88 = vrot.slane %v87, 2
    %v89 = vadd.f32 %v87, %v88
    %v90 = vrot.slane %v89, 1
    %v91 = vadd.f32 %v89, %v90
    %v92 = vrcp.pop %v91
    %v93 = vmul.f32 %v91, %v92
    %v94 = vsub.f32 1.0, %v93
    %v95 = vmul.f32 %v92, %v94
    %v96 = vadd.f32 %v92, %v95
    %vm97 = vweird.f32 %v91
    %vm98 = vweird.f32 %v92
    %vm99 = vmor %vm97, %vm98
    %v100 = vsel %vm99, %v92, %v96
    %v101 = vand.u32 2147483647, %v91
    %vm102 = vcmp.eq.f32.partialorder %v101, 8.507059e+37
    %v103 = vand.u32 %v91, 2147483648
    %v104 = vor.u32 1.1754944e-38, %v103
    %v105 = vsel %vm102, %v104, %v100
    %v106 = vmul.f32 %v84, %v105
    %vm107 = vcmask 0
    %108 = vst.msk [vmem:[#allocation2] sm:$0x1] %vm107, %v106
    // Predicated region
    $region14: #{tpu_custom_call.1} parent=1 // pred_check
      _
    $region15: #{tpu_custom_call.1} parent=1 // pred_check_branch
      %110 = sbr.rel (0) target = $region17
    $region16: #{tpu_custom_call.1} parent=1 // pred_region
      %112 = vsyncadd [#allocation3], 0
      %s114 = sshll.u32 [#allocation2], 4
      %s115 = int_to_ptr.vmem [resolvable:$true] %s114
      %s116 = sshll.u32 %s3, 4
      %s117 = int_to_ptr.hbm [resolvable:$true] %s116
      %119 = dma.vmem_to_hbm [thread:$0]  %s115, 16, %s117, [#allocation3]
    $region17: #{tpu_custom_call.1} parent=1 // pred_fallthru
      _
    // Predicated region
    $region18: #{tpu_custom_call.1} parent=1 // pred_check
      _
    $region19: #{tpu_custom_call.1} parent=1 // pred_check_branch
      %121 = sbr.rel (0) target = $region21
    $region20: #{tpu_custom_call.1} parent=1 // pred_region
      %123 = dma.done [#allocation3], 16
    $region21: #{tpu_custom_call.1} parent=1 // pred_fallthru
      _
    %124 = vsyncpa [#allocation3], 1

</llo_original>
